<compile_context>
chip_gen: v7x
topology: tpu7x:2x2x1
jax: 0.10.0
libtpu: 0.0.40
codegen_flags: <defaults>
</compile_context>

<pallas_src>
import jax
import jax.numpy as jnp
from jax.experimental import pallas as pl
from jax.experimental.pallas import tpu as pltpu

HIDDEN = 32
OUT = 2
OUT_PAD = 128  # lane-dense (multiple-of-128) output width


def mlp_kernel(x_ref, w1_ref, b1_ref, w2_ref, b2_ref, o_ref):
    # First linear: bf16 x @ bf16 W1 on the MXU, f32 accumulation.
    h = jnp.dot(x_ref[...], w1_ref[...], preferred_element_type=jnp.float32)
    h = h + b1_ref[...]                      # (TILE_B, 32) + (1, 32) broadcast, f32 VPU
    h = jnp.maximum(h, 0.0)                  # ReLU, f32 VPU
    # Second linear: tiny (32 x 128, zero-padded) f32 matmul, f32 accumulation.
    out = jnp.dot(h, w2_ref[...], preferred_element_type=jnp.float32)
    out = out + b2_ref[...]                  # (TILE_B, 128) + (1, 128) broadcast
    o_ref[...] = out.astype(o_ref.dtype)     # full-width, unmasked lane-dense store


def _round_up(a, m):
    return ((a + m - 1) // m) * m


def mlp_forward(x, w1_t, b1, w2_t, b2, *, tile_b=512):
    """x: [B, D_in]; w1_t: [D_in, 32]; b1: [1, 32]; w2_t: [32, 2]; b2: [1, 2]."""
    B, D_in = x.shape
    hidden = w1_t.shape[1]
    out_dim = w2_t.shape[1]

    # --- lane-dense padding of the second layer (2 -> 128 output lanes) ---
    w2_p = jnp.zeros((hidden, OUT_PAD), jnp.float32).at[:, :out_dim].set(
        w2_t.astype(jnp.float32))
    b2_p = jnp.zeros((1, OUT_PAD), jnp.float32).at[:, :out_dim].set(
        b2.astype(jnp.float32))

    # --- bf16 streaming of the bandwidth-dominant operands ---
    x_bf = x.astype(jnp.bfloat16)
    w1_bf = w1_t.astype(jnp.bfloat16)
    b1_f = b1.astype(jnp.float32)

    # --- batch tiling: 128-aligned TILE_B, pad B up to a multiple of it ---
    tile_b = max(128, min(tile_b, _round_up(B, 128)))
    tile_b = _round_up(tile_b, 128)
    b_pad = _round_up(B, tile_b)
    if b_pad != B:
        x_bf = jnp.pad(x_bf, ((0, b_pad - B), (0, 0)))
    grid = (b_pad // tile_b,)

    out_padded = pl.pallas_call(
        mlp_kernel,
        out_shape=jax.ShapeDtypeStruct((b_pad, OUT_PAD), jnp.float32),
        grid_spec=pltpu.PrefetchScalarGridSpec(
            num_scalar_prefetch=0,
            grid=grid,
            in_specs=[
                pl.BlockSpec((tile_b, D_in), lambda i: (i, 0)),      # x: streamed tiles
                pl.BlockSpec((D_in, hidden), lambda i: (0, 0)),      # W1: resident
                pl.BlockSpec((1, hidden), lambda i: (0, 0)),         # b1: resident
                pl.BlockSpec((hidden, OUT_PAD), lambda i: (0, 0)),   # W2 (padded): resident
                pl.BlockSpec((1, OUT_PAD), lambda i: (0, 0)),        # b2 (padded): resident
            ],
            out_specs=pl.BlockSpec((tile_b, OUT_PAD), lambda i: (i, 0)),
        ),
        compiler_params=pltpu.CompilerParams(
            dimension_semantics=("parallel",),   # megacore sharding of the batch axis
        ),
    )(x_bf, w1_bf, b1_f, w2_p, b2_p)

    # Drop batch padding and the 126 zero output lanes outside the kernel.
    return out_padded[:B, :out_dim]


def init_params(key, input_size, hidden=HIDDEN, out=OUT, dtype=jnp.float32):
    # Deterministic init mimicking PyTorch's default Linear init
    # (uniform(-1/sqrt(fan_in), 1/sqrt(fan_in))). Weights stored transposed
    # ([in, out]) relative to torch's [out, in] so the kernel computes x @ W + b.
    k1, k2, k3, k4 = jax.random.split(key, 4)
    bound1 = 1.0 / (input_size ** 0.5)
    bound2 = 1.0 / (hidden ** 0.5)
    w1_t = jax.random.uniform(k1, (input_size, hidden), dtype, -bound1, bound1)
    b1 = jax.random.uniform(k2, (1, hidden), dtype, -bound1, bound1)
    w2_t = jax.random.uniform(k3, (hidden, out), dtype, -bound2, bound2)
    b2 = jax.random.uniform(k4, (1, out), dtype, -bound2, bound2)
    return w1_t, b1, w2_t, b2


if __name__ == "__main__":
    key = jax.random.PRNGKey(0)
    kx, kp = jax.random.split(key)

    batch, input_size = 8, 64
    x = jax.random.normal(kx, (batch, input_size), jnp.float32)
    w1_t, b1, w2_t, b2 = init_params(kp, input_size)

    out = mlp_forward(x, w1_t, b1, w2_t, b2)
    out = jax.block_until_ready(out)
    assert out.shape == (batch, OUT)

    # Reference with the same bf16 input/W1 rounding (kernel accumulates in f32),
    # so the comparison stays tight despite the bf16 streaming optimization.
    x_r = x.astype(jnp.bfloat16).astype(jnp.float32)
    w1_r = w1_t.astype(jnp.bfloat16).astype(jnp.float32)
    ref = jnp.maximum(x_r @ w1_r + b1, 0.0) @ w2_t + b2
    assert jnp.allclose(out, ref, atol=1e-3, rtol=1e-3)

    # Loose sanity check against the pure-f32 math of the original module.
    ref_f32 = jnp.maximum(x @ w1_t + b1, 0.0) @ w2_t + b2
    assert jnp.allclose(out, ref_f32, atol=5e-2, rtol=5e-2)

    print("KERNEL_OK")
</pallas_src>

<mosaic_0001>
module attributes {stable_mosaic.version = 11 : i64} {
  func.func @mlp_kernel(%arg0: i32, %arg1: memref<128x64xbf16, #tpu.memory_space<vmem>>, %arg2: memref<64x32xbf16, #tpu.memory_space<vmem>>, %arg3: memref<1x32xf32, #tpu.memory_space<vmem>>, %arg4: memref<32x128xf32, #tpu.memory_space<vmem>>, %arg5: memref<1x128xf32, #tpu.memory_space<vmem>>, %arg6: memref<128x128xf32, #tpu.memory_space<vmem>>) attributes {dimension_semantics = [#tpu.dimension_semantics<parallel>], iteration_bounds = array<i64: 1>, scalar_prefetch = 0 : i64, scratch_operands = 0 : i64, tpu.core_type = #tpu.core_type<tc>, window_params = [{transform_indices = @transform_0, window_bounds = array<i64: 128, 64>}, {pipeline_mode = #tpu.pipeline_mode<synchronous>, transform_indices = @transform_1, window_bounds = array<i64: 64, 32>}, {pipeline_mode = #tpu.pipeline_mode<synchronous>, transform_indices = @transform_2, window_bounds = array<i64: 1, 32>}, {pipeline_mode = #tpu.pipeline_mode<synchronous>, transform_indices = @transform_3, window_bounds = array<i64: 32, 128>}, {pipeline_mode = #tpu.pipeline_mode<synchronous>, transform_indices = @transform_4, window_bounds = array<i64: 1, 128>}, {transform_indices = @transform_5, window_bounds = array<i64: 128, 128>}]} {
    %c0 = arith.constant 0 : index
    %c0_0 = arith.constant 0 : index
    %0 = vector.load %arg1[%c0, %c0_0] : memref<128x64xbf16, #tpu.memory_space<vmem>>, vector<128x64xbf16>
    %c0_1 = arith.constant 0 : index
    %c0_2 = arith.constant 0 : index
    %1 = vector.load %arg2[%c0_1, %c0_2] : memref<64x32xbf16, #tpu.memory_space<vmem>>, vector<64x32xbf16>
    %cst = arith.constant dense<0.000000e+00> : vector<128x32xf32>
    %2 = tpu.matmul %0, %1, %cst {dimension_numbers = #tpu.dot_dimension_numbers<[1], [0], [0], [1], [0, 0, 1, 1], [], []>} : vector<128x64xbf16>, vector<64x32xbf16>, vector<128x32xf32> -> vector<128x32xf32>
    %c0_3 = arith.constant 0 : index
    %c0_4 = arith.constant 0 : index
    %3 = vector.load %arg3[%c0_3, %c0_4] : memref<1x32xf32, #tpu.memory_space<vmem>>, vector<1x32xf32>
    %4 = vector.broadcast %3 : vector<1x32xf32> to vector<128x32xf32>
    %5 = arith.addf %2, %4 : vector<128x32xf32>
    %cst_5 = arith.constant 0.000000e+00 : f32
    %6 = vector.broadcast %cst_5 : f32 to vector<128x32xf32>
    %7 = arith.maximumf %5, %6 : vector<128x32xf32>
    %c0_6 = arith.constant 0 : index
    %c0_7 = arith.constant 0 : index
    %8 = vector.load %arg4[%c0_6, %c0_7] : memref<32x128xf32, #tpu.memory_space<vmem>>, vector<32x128xf32>
    %cst_8 = arith.constant dense<0.000000e+00> : vector<128x128xf32>
    %9 = tpu.matmul %7, %8, %cst_8 {dimension_numbers = #tpu.dot_dimension_numbers<[1], [0], [0], [1], [0, 0, 1, 1], [], []>} : vector<128x32xf32>, vector<32x128xf32>, vector<128x128xf32> -> vector<128x128xf32>
    %c0_9 = arith.constant 0 : index
    %c0_10 = arith.constant 0 : index
    %10 = vector.load %arg5[%c0_9, %c0_10] : memref<1x128xf32, #tpu.memory_space<vmem>>, vector<1x128xf32>
    %11 = vector.broadcast %10 : vector<1x128xf32> to vector<128x128xf32>
    %12 = arith.addf %9, %11 : vector<128x128xf32>
    %c0_11 = arith.constant 0 : index
    %c0_12 = arith.constant 0 : index
    %13 = vector.load %arg6[%c0_11, %c0_12] : memref<128x128xf32, #tpu.memory_space<vmem>>, vector<128x128xf32>
    tpu.vector_store %arg6[%c0_11, %c0_12], %12 {strides = array<i32>} : memref<128x128xf32, #tpu.memory_space<vmem>>, vector<128x128xf32>,
    return
  }
  func.func @transform_0(%arg0: i32) -> (i32, i32) {
    %c0_i32 = arith.constant 0 : i32
    %c0_i32_0 = arith.constant 0 : i32
    return %arg0, %c0_i32 : i32, i32
  }
  func.func @transform_1(%arg0: i32) -> (i32, i32) {
    %c0_i32 = arith.constant 0 : i32
    %c0_i32_0 = arith.constant 0 : i32
    %c0_i32_1 = arith.constant 0 : i32
    return %c0_i32, %c0_i32_0 : i32, i32
  }
  func.func @transform_2(%arg0: i32) -> (i32, i32) {
    %c0_i32 = arith.constant 0 : i32
    %c0_i32_0 = arith.constant 0 : i32
    %c0_i32_1 = arith.constant 0 : i32
    return %c0_i32, %c0_i32_0 : i32, i32
  }
  func.func @transform_3(%arg0: i32) -> (i32, i32) {
    %c0_i32 = arith.constant 0 : i32
    %c0_i32_0 = arith.constant 0 : i32
    %c0_i32_1 = arith.constant 0 : i32
    return %c0_i32, %c0_i32_0 : i32, i32
  }
  func.func @transform_4(%arg0: i32) -> (i32, i32) {
    %c0_i32 = arith.constant 0 : i32
    %c0_i32_0 = arith.constant 0 : i32
    %c0_i32_1 = arith.constant 0 : i32
    return %c0_i32, %c0_i32_0 : i32, i32
  }
  func.func @transform_5(%arg0: i32) -> (i32, i32) {
    %c0_i32 = arith.constant 0 : i32
    %c0_i32_0 = arith.constant 0 : i32
    return %arg0, %c0_i32 : i32, i32
  }
}

</mosaic_0001>

<llo_original>
// kernel: tpu_custom_call.1
$region0: #{tpu_custom_call.1}
  #allocation0 [shape = 'u32[]', space=smem, size = 0x4, offset = 0x4, fixed_abs, tag = 'smem constant byte address 0x4 - core index']
  #allocation1 [shape = 'u32[144,128]{1,0:T(1,128)}', space=vmem, size = 0x12000, scoped, tag = 'internal scratch']
  %s0 = inlined_call_operand.vmem [shape: bf16[128,64], index: 0, kind: input, shape index: {}]
  %s1 = inlined_call_operand.vmem [shape: bf16[64,32], index: 1, kind: input, shape index: {}]
  %s2 = inlined_call_operand.vmem [shape: f32[1,32], index: 2, kind: input, shape index: {}]
  %s3 = inlined_call_operand.vmem [shape: f32[32,128], index: 3, kind: input, shape index: {}]
  %s4 = inlined_call_operand.vmem [shape: f32[1,128], index: 4, kind: input, shape index: {}]
  %s5 = inlined_call_operand.hbm [shape: f32[128,128], index: 5, kind: output, shape index: {}]
  %s6 = sld [smem:[#allocation0]]
  $region30: #{tpu_custom_call.1} parent=0
    _
  %s8 = ssub.s32 1, %s6
  %s9 = scalar_select 0, %s8, %s6
  $region1: #{tpu_custom_call.1} parent=0
    #allocation2 [shape = 'u8[65536]{0}', space=vmem, size = 0x10000, scoped, tag = 'output window, operand 0, single buffered']
    #allocation3 [shape = 's32[1]{0}', space=sflag, size = 0x4, scoped, tag = 'scoped memory for tpu_custom_call.1']
    %10 = vsyncpa [#allocation3], 0
    // Predicated region
    $region2: #{tpu_custom_call.1} parent=1 // pred_check
      _
    $region3: #{tpu_custom_call.1} parent=1 // pred_check_branch
      %12 = sbr.rel (0) target = $region5
    $region4: #{tpu_custom_call.1} parent=1 // pred_region
      _
    $region5: #{tpu_custom_call.1} parent=1 // pred_fallthru
      _
    // Predicated region
    $region6: #{tpu_custom_call.1} parent=1 // pred_check
      _
    $region7: #{tpu_custom_call.1} parent=1 // pred_check_branch
      %14 = sbr.rel (0) target = $region9
    $region8: #{tpu_custom_call.1} parent=1 // pred_region
      _
    $region9: #{tpu_custom_call.1} parent=1 // pred_fallthru
      _
    // Predicated region
    $region10: #{tpu_custom_call.1} parent=1 // pred_check
      _
    $region11: #{tpu_custom_call.1} parent=1 // pred_check_branch
      %16 = sbr.rel (0) target = $region13
    $region12: #{tpu_custom_call.1} parent=1 // pred_region
      _
    $region13: #{tpu_custom_call.1} parent=1 // pred_fallthru
      _
    // Predicated region
    $region14: #{tpu_custom_call.1} parent=1 // pred_check
      _
    $region15: #{tpu_custom_call.1} parent=1 // pred_check_branch
      %18 = sbr.rel (0) target = $region17
    $region16: #{tpu_custom_call.1} parent=1 // pred_region
      _
    $region17: #{tpu_custom_call.1} parent=1 // pred_fallthru
      _
    // Predicated region
    $region18: #{tpu_custom_call.1} parent=1 // pred_check
      _
    $region19: #{tpu_custom_call.1} parent=1 // pred_check_branch
      %20 = sbr.rel (0) target = $region21
    $region20: #{tpu_custom_call.1} parent=1 // pred_region
      _
    $region21: #{tpu_custom_call.1} parent=1 // pred_fallthru
      _
    %v22 = vld [vmem:[%s0] sm:$0xf]
    %v23 = vld [vmem:[%s0 + $0x4] sm:$0xf]
    %v24 = vld [vmem:[%s0 + $0x8] sm:$0xf]
    %v25 = vld [vmem:[%s0 + $0xc] sm:$0xf]
    %v26 = vld [vmem:[%s0 + $0x10] sm:$0xf]
    %v27 = vld [vmem:[%s0 + $0x14] sm:$0xf]
    %v28 = vld [vmem:[%s0 + $0x18] sm:$0xf]
    %v29 = vld [vmem:[%s0 + $0x1c] sm:$0xf]
    %v30 = vld [vmem:[%s0 + $0x20] sm:$0xf]
    %v31 = vld [vmem:[%s0 + $0x24] sm:$0xf]
    %v32 = vld [vmem:[%s0 + $0x28] sm:$0xf]
    %v33 = vld [vmem:[%s0 + $0x2c] sm:$0xf]
    %v34 = vld [vmem:[%s0 + $0x30] sm:$0xf]
    %v35 = vld [vmem:[%s0 + $0x34] sm:$0xf]
    %v36 = vld [vmem:[%s0 + $0x38] sm:$0xf]
    %v37 = vld [vmem:[%s0 + $0x3c] sm:$0xf]
    %v38 = vld [vmem:[%s1] sm:$0xf]
    %v39 = vld [vmem:[%s1 + $0x4] sm:$0xf]
    %v40 = vld [vmem:[%s1 + $0x8] sm:$0xf]
    %v41 = vld [vmem:[%s1 + $0xc] sm:$0xf]
    %v42 = vld [vmem:[%s1 + $0x10] sm:$0xf]
    %v43 = vld [vmem:[%s1 + $0x14] sm:$0xf]
    %v44 = vld [vmem:[%s1 + $0x18] sm:$0xf]
    %v45 = vld [vmem:[%s1 + $0x1c] sm:$0xf]
    %v46 = vld [vmem:[%s2] sm:$0x1]
    %v48 = vlaneseq
    %v49 = vshrl.u32 %v48, 7
    %v50 = vsub.s32 0, %v49
    %v51 = vrot.slane %v46, %v50
    %v69 = vunpack.c.l.b16 %v22
    %v70 = vunpack.c.l.b16 %v23
    %v71 = vunpack.c.l.b16 %v24
    %v72 = vunpack.c.l.b16 %v25
    %v73 = vunpack.c.l.b16 %v26
    %v74 = vunpack.c.l.b16 %v27
    %v75 = vunpack.c.l.b16 %v28
    %v76 = vunpack.c.l.b16 %v29
    %v77 = vunpack.c.l.b16 %v30
    %v78 = vunpack.c.l.b16 %v31
    %v79 = vunpack.c.l.b16 %v32
    %v80 = vunpack.c.l.b16 %v33
    %v81 = vunpack.c.l.b16 %v34
    %v82 = vunpack.c.l.b16 %v35
    %v83 = vunpack.c.l.b16 %v36
    %v84 = vunpack.c.l.b16 %v37
    %v85 = vpack.c.b16 %v70, %v69
    %v86 = vpack.c.b16 %v72, %v71
    %v87 = vpack.c.b16 %v74, %v73
    %v88 = vpack.c.b16 %v76, %v75
    %v89 = vpack.c.b16 %v78, %v77
    %v90 = vpack.c.b16 %v80, %v79
    %v91 = vpack.c.b16 %v82, %v81
    %v92 = vpack.c.b16 %v84, %v83
    %v101 = vunpack.c.l.b16 %v38
    %v102 = vunpack.c.l.b16 %v39
    %v103 = vunpack.c.l.b16 %v40
    %v104 = vunpack.c.l.b16 %v41
    %v105 = vunpack.c.l.b16 %v42
    %v106 = vunpack.c.l.b16 %v43
    %v107 = vunpack.c.l.b16 %v44
    %v108 = vunpack.c.l.b16 %v45
    %v109 = vpack.c.b16 %v102, %v101
    %v110 = vpack.c.b16 %v104, %v103
    %v111 = vpack.c.b16 %v106, %v105
    %v112 = vpack.c.b16 %v108, %v107
    %vm117 = vcmask 523264
    %v119 = vsel %vm117, %v85, 0
    %v122 = vsel %vm117, %v86, 0
    %v125 = vsel %vm117, %v87, 0
    %v128 = vsel %vm117, %v88, 0
    %v131 = vsel %vm117, %v89, 0
    %v134 = vsel %vm117, %v90, 0
    %v137 = vsel %vm117, %v91, 0
    %v140 = vsel %vm117, %v92, 0
    %142 = vmatprep.subr.bf16.mxu0 0
    %143 = vmatpush1.bf16.msra.mxu0 %v109
    %144 = vmatprep.subr.bf16.mxu0 0
    %145 = vmatpush1.bf16.msra.mxu0 %v110
    %146 = vmatprep.subr.bf16.mxu0 0
    %147 = vmatpush1.bf16.msra.mxu0 %v111
    %148 = vmatprep.subr.bf16.mxu0 0
    %149 = vmatpush1.bf16.msra.mxu0 %v112
    %150 = vmatprep.subr.bf16.mxu0 0
    %151 = vmatpush1.bf16.msra.mxu0 0
    %152 = vmatprep.subr.bf16.mxu0 0
    %153 = vmatpush1.bf16.msra.mxu0 0
    %154 = vmatprep.subr.bf16.mxu0 0
    %155 = vmatpush1.bf16.msra.mxu0 0
    %156 = vmatprep.subr.bf16.mxu0 0
    %157 = vmatpush1.bf16.msra.mxu0 0
    %158 = vmatprep.subr.bf16.mxu0 0
    %159 = vmatpush1.bf16.msra.mxu0 0
    %160 = vmatprep.subr.bf16.mxu0 0
    %161 = vmatpush1.bf16.msra.mxu0 0
    %162 = vmatprep.subr.bf16.mxu0 0
    %163 = vmatpush1.bf16.msra.mxu0 0
    %164 = vmatprep.subr.bf16.mxu0 0
    %165 = vmatpush1.bf16.msra.mxu0 0
    %166 = vmatprep.subr.bf16.mxu0 0
    %167 = vmatpush1.bf16.msra.mxu0 0
    %168 = vmatprep.subr.bf16.mxu0 0
    %169 = vmatpush1.bf16.msra.mxu0 0
    %170 = vmatprep.subr.bf16.mxu0 0
    %171 = vmatpush1.bf16.msra.mxu0 0
    %172 = vmatprep.subr.bf16.mxu0 0
    %173 = vmatpush1.bf16.msra.mxu0 0
    %174 = vmatprep.mubr.bf16.mxu0 0
    %175 = vmatmul.mubr.bf16.gmra.mrb[0].mxu0 %v119
    %v176 = vpop.f32.mrb[0].mxu0
    %v177 = vadd.f32 %v51, %v176
    %v178 = vpop.f32.mrb[0].mxu0
    %v179 = vpop.f32.mrb[0].mxu0
    %v180 = vadd.f32 %v51, %v179
    %v181 = vpop.f32.mrb[0].mxu0
    %182 = vmatprep.mubr.bf16.mxu0 0
    %183 = vmatmul.mubr.bf16.gmra.mrb[0].mxu0 %v122
    %v184 = vpop.f32.mrb[0].mxu0
    %v185 = vadd.f32 %v51, %v184
    %v186 = vpop.f32.mrb[0].mxu0
    %v187 = vpop.f32.mrb[0].mxu0
    %v188 = vadd.f32 %v51, %v187
    %v189 = vpop.f32.mrb[0].mxu0
    %190 = vmatprep.mubr.bf16.mxu0 0
    %191 = vmatmul.mubr.bf16.gmra.mrb[0].mxu0 %v125
    %v192 = vpop.f32.mrb[0].mxu0
    %v193 = vadd.f32 %v51, %v192
    %v194 = vpop.f32.mrb[0].mxu0
    %v195 = vpop.f32.mrb[0].mxu0
    %v196 = vadd.f32 %v51, %v195
    %v197 = vpop.f32.mrb[0].mxu0
    %198 = vmatprep.mubr.bf16.mxu0 0
    %199 = vmatmul.mubr.bf16.gmra.mrb[0].mxu0 %v128
    %v200 = vpop.f32.mrb[0].mxu0
    %v201 = vadd.f32 %v51, %v200
    %v202 = vpop.f32.mrb[0].mxu0
    %v203 = vpop.f32.mrb[0].mxu0
    %v204 = vadd.f32 %v51, %v203
    %v205 = vpop.f32.mrb[0].mxu0
    %206 = vmatprep.mubr.bf16.mxu0 0
    %207 = vmatmul.mubr.bf16.gmra.mrb[0].mxu0 %v131
    %v208 = vpop.f32.mrb[0].mxu0
    %v209 = vadd.f32 %v51, %v208
    %v210 = vpop.f32.mrb[0].mxu0
    %v211 = vpop.f32.mrb[0].mxu0
    %v212 = vadd.f32 %v51, %v211
    %v213 = vpop.f32.mrb[0].mxu0
    %214 = vmatprep.mubr.bf16.mxu0 0
    %215 = vmatmul.mubr.bf16.gmra.mrb[0].mxu0 %v134
    %v216 = vpop.f32.mrb[0].mxu0
    %v217 = vadd.f32 %v51, %v216
    %v218 = vpop.f32.mrb[0].mxu0
    %v219 = vpop.f32.mrb[0].mxu0
    %v220 = vadd.f32 %v51, %v219
    %v221 = vpop.f32.mrb[0].mxu0
    %222 = vmatprep.mubr.bf16.mxu0 0
    %223 = vmatmul.mubr.bf16.gmra.mrb[0].mxu0 %v137
    %v224 = vpop.f32.mrb[0].mxu0
    %v225 = vadd.f32 %v51, %v224
    %v226 = vpop.f32.mrb[0].mxu0
    %v227 = vpop.f32.mrb[0].mxu0
    %v228 = vadd.f32 %v51, %v227
    %v229 = vpop.f32.mrb[0].mxu0
    %230 = vmatprep.mubr.bf16.mxu0 0
    %231 = vmatmul.mubr.bf16.gmra.mrb[0].mxu0 %v140
    %v232 = vpop.f32.mrb[0].mxu0
    %v233 = vadd.f32 %v51, %v232
    %v234 = vpop.f32.mrb[0].mxu0
    %v235 = vpop.f32.mrb[0].mxu0
    %v236 = vadd.f32 %v51, %v235
    %v237 = vpop.f32.mrb[0].mxu0
    %238 = vdwg.mxu0
    %v239 = vmax.f32 %v177, 0.0
    %v240 = vmax.f32 %v180, 0.0
    %v241 = vmax.f32 %v185, 0.0
    %v242 = vmax.f32 %v188, 0.0
    %v243 = vmax.f32 %v193, 0.0
    %v244 = vmax.f32 %v196, 0.0
    %v245 = vmax.f32 %v201, 0.0
    %v246 = vmax.f32 %v204, 0.0
    %v247 = vmax.f32 %v209, 0.0
    %v248 = vmax.f32 %v212, 0.0
    %v249 = vmax.f32 %v217, 0.0
    %v250 = vmax.f32 %v220, 0.0
    %v251 = vmax.f32 %v225, 0.0
    %v252 = vmax.f32 %v228, 0.0
    %v253 = vmax.f32 %v233, 0.0
    %v254 = vmax.f32 %v236, 0.0
    %v255 = vld [vmem:[%s3] sm:$0xff]
    %v256 = vld [vmem:[%s3 + $0x8] sm:$0xff]
    %v257 = vld [vmem:[%s3 + $0x10] sm:$0xff]
    %v258 = vld [vmem:[%s3 + $0x18] sm:$0xff]
    %v259 = vld [vmem:[%s4] sm:$0x1]
    %v261 = vlaneseq
    %v262 = vshrl.u32 %v261, 7
    %v263 = vsub.s32 0, %v262
    %v264 = vrot.slane %v259, %v263
    %vm266 = vcmask 261120
    %v268 = vsel %vm266, %v239, 0
    %v271 = vsel %vm266, %v240, 0
    %v274 = vsel %vm266, %v241, 0
    %v277 = vsel %vm266, %v242, 0
    %v280 = vsel %vm266, %v243, 0
    %v283 = vsel %vm266, %v244, 0
    %v286 = vsel %vm266, %v245, 0
    %v289 = vsel %vm266, %v246, 0
    %v292 = vsel %vm266, %v247, 0
    %v295 = vsel %vm266, %v248, 0
    %v298 = vsel %vm266, %v249, 0
    %v301 = vsel %vm266, %v250, 0
    %v304 = vsel %vm266, %v251, 0
    %v307 = vsel %vm266, %v252, 0
    %v310 = vsel %vm266, %v253, 0
    %v313 = vsel %vm266, %v254, 0
    %315 = vmatprep.subr.mxu0 0.0
    %316 = vmatpush1.msra.mxu0 %v255
    %317 = vmatprep.subr.mxu0 0.0
    %318 = vmatpush1.msra.mxu0 %v256
    %319 = vmatprep.subr.mxu0 0.0
    %320 = vmatpush1.msra.mxu0 %v257
    %321 = vmatprep.subr.mxu0 0.0
    %322 = vmatpush1.msra.mxu0 %v258
    %323 = vmatprep.subr.mxu0 0.0
    %324 = vmatpush1.msra.mxu0 0.0
    %325 = vmatprep.subr.mxu0 0.0
    %326 = vmatpush1.msra.mxu0 0.0
    %327 = vmatprep.subr.mxu0 0.0
    %328 = vmatpush1.msra.mxu0 0.0
    %329 = vmatprep.subr.mxu0 0.0
    %330 = vmatpush1.msra.mxu0 0.0
    %331 = vmatprep.subr.mxu0 0.0
    %332 = vmatpush1.msra.mxu0 0.0
    %333 = vmatprep.subr.mxu0 0.0
    %334 = vmatpush1.msra.mxu0 0.0
    %335 = vmatprep.subr.mxu0 0.0
    %336 = vmatpush1.msra.mxu0 0.0
    %337 = vmatprep.subr.mxu0 0.0
    %338 = vmatpush1.msra.mxu0 0.0
    %339 = vmatprep.subr.mxu0 0.0
    %340 = vmatpush1.msra.mxu0 0.0
    %341 = vmatprep.subr.mxu0 0.0
    %342 = vmatpush1.msra.mxu0 0.0
    %343 = vmatprep.subr.mxu0 0.0
    %344 = vmatpush1.msra.mxu0 0.0
    %345 = vmatprep.subr.mxu0 0.0
    %346 = vmatpush1.msra.mxu0 0.0
    %347 = vmatprep.subr.mxu0 0.0
    %348 = vmatpush1.msra.mxu0 0.0
    %349 = vmatprep.subr.mxu0 0.0
    %350 = vmatpush1.msra.mxu0 0.0
    %351 = vmatprep.subr.mxu0 0.0
    %352 = vmatpush1.msra.mxu0 0.0
    %353 = vmatprep.subr.mxu0 0.0
    %354 = vmatpush1.msra.mxu0 0.0
    %355 = vmatprep.subr.mxu0 0.0
    %356 = vmatpush1.msra.mxu0 0.0
    %357 = vmatprep.subr.mxu0 0.0
    %358 = vmatpush1.msra.mxu0 0.0
    %359 = vmatprep.subr.mxu0 0.0
    %360 = vmatpush1.msra.mxu0 0.0
    %361 = vmatprep.subr.mxu0 0.0
    %362 = vmatpush1.msra.mxu0 0.0
    %363 = vmatprep.subr.mxu0 0.0
    %364 = vmatpush1.msra.mxu0 0.0
    %365 = vmatprep.subr.mxu0 0.0
    %366 = vmatpush1.msra.mxu0 0.0
    %367 = vmatprep.subr.mxu0 0.0
    %368 = vmatpush1.msra.mxu0 0.0
    %369 = vmatprep.subr.mxu0 0.0
    %370 = vmatpush1.msra.mxu0 0.0
    %371 = vmatprep.subr.mxu0 0.0
    %372 = vmatpush1.msra.mxu0 0.0
    %373 = vmatprep.subr.mxu0 0.0
    %374 = vmatpush1.msra.mxu0 0.0
    %375 = vmatprep.subr.mxu0 0.0
    %376 = vmatpush1.msra.mxu0 0.0
    %377 = vmatprep.subr.mxu0 0.0
    %378 = vmatpush1.msra.mxu0 0.0
    %379 = vmatprep.mubr.f32.mxu0 0.0
    %380 = vmatmul.mubr.f32.gmra.mrb[0].mxu0 %v268
    %v381 = vpop.f32.mrb[0].mxu0
    %v382 = vadd.f32 %v264, %v381
    %v383 = vpop.f32.mrb[0].mxu0
    %384 = vmatprep.mubr.f32.mxu0 0.0
    %385 = vmatmul.mubr.f32.gmra.mrb[0].mxu0 %v271
    %v386 = vpop.f32.mrb[0].mxu0
    %v387 = vadd.f32 %v264, %v386
    %v388 = vpop.f32.mrb[0].mxu0
    %389 = vmatprep.mubr.f32.mxu0 0.0
    %390 = vmatmul.mubr.f32.gmra.mrb[0].mxu0 %v274
    %v391 = vpop.f32.mrb[0].mxu0
    %v392 = vadd.f32 %v264, %v391
    %v393 = vpop.f32.mrb[0].mxu0
    %394 = vmatprep.mubr.f32.mxu0 0.0
    %395 = vmatmul.mubr.f32.gmra.mrb[0].mxu0 %v277
    %v396 = vpop.f32.mrb[0].mxu0
    %v397 = vadd.f32 %v264, %v396
    %v398 = vpop.f32.mrb[0].mxu0
    %399 = vmatprep.mubr.f32.mxu0 0.0
    %400 = vmatmul.mubr.f32.gmra.mrb[0].mxu0 %v280
    %v401 = vpop.f32.mrb[0].mxu0
    %v402 = vadd.f32 %v264, %v401
    %v403 = vpop.f32.mrb[0].mxu0
    %404 = vmatprep.mubr.f32.mxu0 0.0
    %405 = vmatmul.mubr.f32.gmra.mrb[0].mxu0 %v283
    %v406 = vpop.f32.mrb[0].mxu0
    %v407 = vadd.f32 %v264, %v406
    %v408 = vpop.f32.mrb[0].mxu0
    %409 = vmatprep.mubr.f32.mxu0 0.0
    %410 = vmatmul.mubr.f32.gmra.mrb[0].mxu0 %v286
    %v411 = vpop.f32.mrb[0].mxu0
    %v412 = vadd.f32 %v264, %v411
    %v413 = vpop.f32.mrb[0].mxu0
    %414 = vmatprep.mubr.f32.mxu0 0.0
    %415 = vmatmul.mubr.f32.gmra.mrb[0].mxu0 %v289
    %v416 = vpop.f32.mrb[0].mxu0
    %v417 = vadd.f32 %v264, %v416
    %v418 = vpop.f32.mrb[0].mxu0
    %419 = vmatprep.mubr.f32.mxu0 0.0
    %420 = vmatmul.mubr.f32.gmra.mrb[0].mxu0 %v292
    %v421 = vpop.f32.mrb[0].mxu0
    %v422 = vadd.f32 %v264, %v421
    %v423 = vpop.f32.mrb[0].mxu0
    %424 = vmatprep.mubr.f32.mxu0 0.0
    %425 = vmatmul.mubr.f32.gmra.mrb[0].mxu0 %v295
    %v426 = vpop.f32.mrb[0].mxu0
    %v427 = vadd.f32 %v264, %v426
    %v428 = vpop.f32.mrb[0].mxu0
    %429 = vmatprep.mubr.f32.mxu0 0.0
    %430 = vmatmul.mubr.f32.gmra.mrb[0].mxu0 %v298
    %v431 = vpop.f32.mrb[0].mxu0
    %v432 = vadd.f32 %v264, %v431
    %v433 = vpop.f32.mrb[0].mxu0
    %434 = vmatprep.mubr.f32.mxu0 0.0
    %435 = vmatmul.mubr.f32.gmra.mrb[0].mxu0 %v301
    %v436 = vpop.f32.mrb[0].mxu0
    %v437 = vadd.f32 %v264, %v436
    %v438 = vpop.f32.mrb[0].mxu0
    %439 = vmatprep.mubr.f32.mxu0 0.0
    %440 = vmatmul.mubr.f32.gmra.mrb[0].mxu0 %v304
    %v441 = vpop.f32.mrb[0].mxu0
    %v442 = vadd.f32 %v264, %v441
    %v443 = vpop.f32.mrb[0].mxu0
    %444 = vmatprep.mubr.f32.mxu0 0.0
    %445 = vmatmul.mubr.f32.gmra.mrb[0].mxu0 %v307
    %v446 = vpop.f32.mrb[0].mxu0
    %v447 = vadd.f32 %v264, %v446
    %v448 = vpop.f32.mrb[0].mxu0
    %449 = vmatprep.mubr.f32.mxu0 0.0
    %450 = vmatmul.mubr.f32.gmra.mrb[0].mxu0 %v310
    %v451 = vpop.f32.mrb[0].mxu0
    %v452 = vadd.f32 %v264, %v451
    %v453 = vpop.f32.mrb[0].mxu0
    %454 = vmatprep.mubr.f32.mxu0 0.0
    %455 = vmatmul.mubr.f32.gmra.mrb[0].mxu0 %v313
    %v456 = vpop.f32.mrb[0].mxu0
    %v457 = vadd.f32 %v264, %v456
    %v458 = vpop.f32.mrb[0].mxu0
    %459 = vdwg.mxu0
    %460 = vst [vmem:[#allocation2] sm:$0xff] %v382
    %461 = vst [vmem:[#allocation2 + $0x8] sm:$0xff] %v387
    %462 = vst [vmem:[#allocation2 + $0x10] sm:$0xff] %v392
    %463 = vst [vmem:[#allocation2 + $0x18] sm:$0xff] %v397
    %464 = vst [vmem:[#allocation2 + $0x20] sm:$0xff] %v402
    %465 = vst [vmem:[#allocation2 + $0x28] sm:$0xff] %v407
    %466 = vst [vmem:[#allocation2 + $0x30] sm:$0xff] %v412
    %467 = vst [vmem:[#allocation2 + $0x38] sm:$0xff] %v417
    %468 = vst [vmem:[#allocation2 + $0x40] sm:$0xff] %v422
    %469 = vst [vmem:[#allocation2 + $0x48] sm:$0xff] %v427
    %470 = vst [vmem:[#allocation2 + $0x50] sm:$0xff] %v432
    %471 = vst [vmem:[#allocation2 + $0x58] sm:$0xff] %v437
    %472 = vst [vmem:[#allocation2 + $0x60] sm:$0xff] %v442
    %473 = vst [vmem:[#allocation2 + $0x68] sm:$0xff] %v447
    %474 = vst [vmem:[#allocation2 + $0x70] sm:$0xff] %v452
    %475 = vst [vmem:[#allocation2 + $0x78] sm:$0xff] %v457
    // Predicated region
    $region22: #{tpu_custom_call.1} parent=1 // pred_check
      _
    $region23: #{tpu_custom_call.1} parent=1 // pred_check_branch
      %477 = sbr.rel (0) target = $region25
    $region24: #{tpu_custom_call.1} parent=1 // pred_region
      %s479 = ssub.s32 2048, 2048
      %480 = vsyncadd [#allocation3], %s479
      %s481 = sshll.u32 [#allocation2], 4
      %s482 = int_to_ptr.vmem [resolvable:$true] %s481
      %487 = dma.vmem_to_hbm [thread:$0]  %s482, 2048, %s5, [#allocation3], 128, 128, 8
    $region25: #{tpu_custom_call.1} parent=1 // pred_fallthru
      _
    // Predicated region
    $region26: #{tpu_custom_call.1} parent=1 // pred_check
      _
    $region27: #{tpu_custom_call.1} parent=1 // pred_check_branch
      %489 = sbr.rel (0) target = $region29
    $region28: #{tpu_custom_call.1} parent=1 // pred_region
      %490 = dma.done [#allocation3], 2048
    $region29: #{tpu_custom_call.1} parent=1 // pred_fallthru
      _
    %491 = vsyncpa [#allocation3], 1

</llo_original>
